<compile_context>
chip_gen: v7x
topology: tpu7x:2x2x1
jax: 0.10.0
libtpu: 0.0.40
codegen_flags: <defaults>
</compile_context>

<pallas_src>
import jax
import jax.numpy as jnp
from jax.experimental import pallas as pl
from jax.experimental.pallas import tpu as pltpu

GROUP = 16  # input rows packed per 128-lane row (16 * 8 features = 128 lanes)


def mlp_kernel(x_ref, w1_ref, b1_ref, w234_ref, b234_ref, o_ref):
    # x_ref: [tb/16, 128] (16 packed rows per lane-row)
    # layer_1 + ReLU on the block-diagonal weights: [tb/16,128]@[128,512]
    h1 = jnp.dot(x_ref[...], w1_ref[...], preferred_element_type=jnp.float32)
    h1 = jnp.maximum(h1 + b1_ref[...], 0.0)
    # folded layer_2..layer_4 (block-diagonal, stationary weight):
    # [tb/16,512]@[512,16] -> [tb/16,16]
    out = jnp.dot(h1, w234_ref[...], preferred_element_type=jnp.float32)
    o_ref[...] = (out + b234_ref[...]).astype(o_ref.dtype)


def _round_up(n: int, m: int) -> int:
    return ((n + m - 1) // m) * m


def prepare_params(params):
    """One-time preprocessing (hoisted out of the forward pass):
      * fold layer_2..layer_4 (no nonlinearity between them) into w234/b234,
      * build block-diagonal lane-packed weights (16 copies along the diagonal).
    params holds pre-transposed weights w{i}: [in, out] and biases b{i}: [1, out]."""
    w234 = params["w2"] @ params["w3"] @ params["w4"]                      # [32, 1]
    b234 = (params["b2"] @ params["w3"] @ params["w4"]
            + params["b3"] @ params["w4"] + params["b4"])                  # [1, 1]

    eye = jnp.eye(GROUP, dtype=jnp.float32)
    w1_bd = jnp.kron(eye, params["w1"])          # [128, 512] block-diag of w1 [8,32]
    b1_bd = jnp.tile(params["b1"], (1, GROUP))   # [1, 512]
    w234_bd = jnp.kron(eye, w234)                # [512, 16] block-diag of w234 [32,1]
    b234_bd = jnp.tile(b234, (1, GROUP))         # [1, 16]
    return {"w1_bd": w1_bd, "b1_bd": b1_bd, "w234_bd": w234_bd, "b234_bd": b234_bd}


def _choose_tiling(batch: int, block_batch: int):
    """Pick (tile_rows, num_tiles) so tiles are balanced (last tile isn't mostly
    padding), tile_rows is a multiple of 128 (lane/sublane alignment of the
    packed layout), and there are >=2 tiles for moderate/large B (v7x megacore)."""
    num_tiles = max(pl.cdiv(batch, block_batch), 1)
    if batch >= 2 * 128:           # enough rows to meaningfully split across 2 TCs
        num_tiles = max(num_tiles, 2)
    tile_rows = _round_up(pl.cdiv(batch, num_tiles), 128)
    return tile_rows, num_tiles


def salary_predictor_forward(x, prepared, *, block_batch=16384):
    """x: [B, 8] float32.  prepared: output of prepare_params()."""
    B = x.shape[0]
    tb, num_tiles = _choose_tiling(B, block_batch)
    b_pad = num_tiles * tb
    if b_pad != B:
        x = jnp.pad(x, ((0, b_pad - B), (0, 0)))

    # Lane-pack 16 rows per 128-lane row (free, row-major contiguous reshape).
    x_packed = x.reshape(b_pad // GROUP, GROUP * 8)          # [b_pad/16, 128]

    out_packed = pl.pallas_call(
        mlp_kernel,
        out_shape=jax.ShapeDtypeStruct((b_pad // GROUP, GROUP), jnp.float32),
        grid=(num_tiles,),
        in_specs=[
            pl.BlockSpec((tb // GROUP, 128), lambda i: (i, 0)),   # x tile (pipelined)
            pl.BlockSpec((128, 512), lambda i: (0, 0)),           # W1_bd   (resident)
            pl.BlockSpec((1, 512), lambda i: (0, 0)),             # b1_bd   (resident)
            pl.BlockSpec((512, GROUP), lambda i: (0, 0)),         # W234_bd (resident)
            pl.BlockSpec((1, GROUP), lambda i: (0, 0)),           # b234_bd (resident)
        ],
        out_specs=pl.BlockSpec((tb // GROUP, GROUP), lambda i: (i, 0)),
        compiler_params=pltpu.CompilerParams(
            dimension_semantics=("parallel",)),
    )(x_packed, prepared["w1_bd"], prepared["b1_bd"],
      prepared["w234_bd"], prepared["b234_bd"])

    # [b_pad/16, 16] -> [b_pad, 1] is a free row-major reshape; drop padded rows.
    return out_packed.reshape(b_pad, 1)[:B]


def init_params(key):
    """Deterministic init mimicking PyTorch nn.Linear default:
    U(-1/sqrt(fan_in), 1/sqrt(fan_in)) for weights and biases.
    Weights stored as [in, out] (transposed relative to torch's [out, in])."""
    dims = [(8, 32), (32, 16), (16, 4), (4, 1)]
    params = {}
    for idx, (fan_in, fan_out) in enumerate(dims, start=1):
        key, kw, kb = jax.random.split(key, 3)
        bound = 1.0 / jnp.sqrt(jnp.float32(fan_in))
        params[f"w{idx}"] = jax.random.uniform(
            kw, (fan_in, fan_out), jnp.float32, minval=-bound, maxval=bound)
        params[f"b{idx}"] = jax.random.uniform(
            kb, (1, fan_out), jnp.float32, minval=-bound, maxval=bound)
    return params


def reference_forward(x, params):
    """Unfused 4-layer reference (matches the PyTorch module's forward exactly)."""
    h1 = jnp.maximum(x @ params["w1"] + params["b1"], 0.0)
    h2 = h1 @ params["w2"] + params["b2"]
    h3 = h2 @ params["w3"] + params["b3"]
    return h3 @ params["w4"] + params["b4"]


if __name__ == "__main__":
    key = jax.random.PRNGKey(0)
    key, kx = jax.random.split(key)
    batch = 8
    x = jax.random.normal(kx, (batch, 8), jnp.float32)

    params = init_params(key)
    prepared = prepare_params(params)          # one-time weight folding / packing

    out = salary_predictor_forward(x, prepared)
    out = jax.block_until_ready(out)

    ref = reference_forward(x, params)
    assert out.shape == (batch, 1)
    assert jnp.allclose(out, ref, atol=1e-4, rtol=1e-4), (
        f"max abs err {jnp.max(jnp.abs(out - ref))}")

    # Quick sanity run at a larger, multi-tile batch (exercises padding + grid).
    key, kx2 = jax.random.split(key)
    x_big = jax.random.normal(kx2, (3000, 8), jnp.float32)
    out_big = jax.block_until_ready(salary_predictor_forward(x_big, prepared,
                                                             block_batch=1024))
    ref_big = reference_forward(x_big, params)
    assert out_big.shape == (3000, 1)
    assert jnp.allclose(out_big, ref_big, atol=1e-4, rtol=1e-4), (
        f"max abs err {jnp.max(jnp.abs(out_big - ref_big))}")

    print("KERNEL_OK")
</pallas_src>

<mosaic_0001>
module attributes {stable_mosaic.version = 11 : i64} {
  func.func @mlp_kernel(%arg0: i32, %arg1: memref<8x128xf32, #tpu.memory_space<vmem>>, %arg2: memref<128x512xf32, #tpu.memory_space<vmem>>, %arg3: memref<1x512xf32, #tpu.memory_space<vmem>>, %arg4: memref<512x16xf32, #tpu.memory_space<vmem>>, %arg5: memref<1x16xf32, #tpu.memory_space<vmem>>, %arg6: memref<8x16xf32, #tpu.memory_space<vmem>>) attributes {dimension_semantics = [#tpu.dimension_semantics<parallel>], iteration_bounds = array<i64: 1>, scalar_prefetch = 0 : i64, scratch_operands = 0 : i64, tpu.core_type = #tpu.core_type<tc>, window_params = [{transform_indices = @transform_0, window_bounds = array<i64: 8, 128>}, {pipeline_mode = #tpu.pipeline_mode<synchronous>, transform_indices = @transform_1, window_bounds = array<i64: 128, 512>}, {pipeline_mode = #tpu.pipeline_mode<synchronous>, transform_indices = @transform_2, window_bounds = array<i64: 1, 512>}, {pipeline_mode = #tpu.pipeline_mode<synchronous>, transform_indices = @transform_3, window_bounds = array<i64: 512, 16>}, {pipeline_mode = #tpu.pipeline_mode<synchronous>, transform_indices = @transform_4, window_bounds = array<i64: 1, 16>}, {transform_indices = @transform_5, window_bounds = array<i64: 8, 16>}]} {
    %c0 = arith.constant 0 : index
    %c0_0 = arith.constant 0 : index
    %0 = vector.load %arg1[%c0, %c0_0] : memref<8x128xf32, #tpu.memory_space<vmem>>, vector<8x128xf32>
    %c0_1 = arith.constant 0 : index
    %c0_2 = arith.constant 0 : index
    %1 = vector.load %arg2[%c0_1, %c0_2] : memref<128x512xf32, #tpu.memory_space<vmem>>, vector<128x512xf32>
    %cst = arith.constant dense<0.000000e+00> : vector<8x512xf32>
    %2 = tpu.matmul %0, %1, %cst {dimension_numbers = #tpu.dot_dimension_numbers<[1], [0], [0], [1], [0, 0, 1, 1], [], []>} : vector<8x128xf32>, vector<128x512xf32>, vector<8x512xf32> -> vector<8x512xf32>
    %c0_3 = arith.constant 0 : index
    %c0_4 = arith.constant 0 : index
    %3 = vector.load %arg3[%c0_3, %c0_4] : memref<1x512xf32, #tpu.memory_space<vmem>>, vector<1x512xf32>
    %4 = vector.broadcast %3 : vector<1x512xf32> to vector<8x512xf32>
    %5 = arith.addf %2, %4 : vector<8x512xf32>
    %cst_5 = arith.constant 0.000000e+00 : f32
    %6 = vector.broadcast %cst_5 : f32 to vector<8x512xf32>
    %7 = arith.maximumf %5, %6 : vector<8x512xf32>
    %c0_6 = arith.constant 0 : index
    %c0_7 = arith.constant 0 : index
    %8 = vector.load %arg4[%c0_6, %c0_7] : memref<512x16xf32, #tpu.memory_space<vmem>>, vector<512x16xf32>
    %cst_8 = arith.constant dense<0.000000e+00> : vector<8x16xf32>
    %9 = tpu.matmul %7, %8, %cst_8 {dimension_numbers = #tpu.dot_dimension_numbers<[1], [0], [0], [1], [0, 0, 1, 1], [], []>} : vector<8x512xf32>, vector<512x16xf32>, vector<8x16xf32> -> vector<8x16xf32>
    %c0_9 = arith.constant 0 : index
    %c0_10 = arith.constant 0 : index
    %10 = vector.load %arg5[%c0_9, %c0_10] : memref<1x16xf32, #tpu.memory_space<vmem>>, vector<1x16xf32>
    %11 = vector.broadcast %10 : vector<1x16xf32> to vector<8x16xf32>
    %12 = arith.addf %9, %11 : vector<8x16xf32>
    %c0_11 = arith.constant 0 : index
    %c0_12 = arith.constant 0 : index
    %13 = vector.load %arg6[%c0_11, %c0_12] : memref<8x16xf32, #tpu.memory_space<vmem>>, vector<8x16xf32>
    tpu.vector_store %arg6[%c0_11, %c0_12], %12 {strides = array<i32>} : memref<8x16xf32, #tpu.memory_space<vmem>>, vector<8x16xf32>,
    return
  }
  func.func @transform_0(%arg0: i32) -> (i32, i32) {
    %c0_i32 = arith.constant 0 : i32
    %c0_i32_0 = arith.constant 0 : i32
    return %arg0, %c0_i32 : i32, i32
  }
  func.func @transform_1(%arg0: i32) -> (i32, i32) {
    %c0_i32 = arith.constant 0 : i32
    %c0_i32_0 = arith.constant 0 : i32
    %c0_i32_1 = arith.constant 0 : i32
    return %c0_i32, %c0_i32_0 : i32, i32
  }
  func.func @transform_2(%arg0: i32) -> (i32, i32) {
    %c0_i32 = arith.constant 0 : i32
    %c0_i32_0 = arith.constant 0 : i32
    %c0_i32_1 = arith.constant 0 : i32
    return %c0_i32, %c0_i32_0 : i32, i32
  }
  func.func @transform_3(%arg0: i32) -> (i32, i32) {
    %c0_i32 = arith.constant 0 : i32
    %c0_i32_0 = arith.constant 0 : i32
    %c0_i32_1 = arith.constant 0 : i32
    return %c0_i32, %c0_i32_0 : i32, i32
  }
  func.func @transform_4(%arg0: i32) -> (i32, i32) {
    %c0_i32 = arith.constant 0 : i32
    %c0_i32_0 = arith.constant 0 : i32
    %c0_i32_1 = arith.constant 0 : i32
    return %c0_i32, %c0_i32_0 : i32, i32
  }
  func.func @transform_5(%arg0: i32) -> (i32, i32) {
    %c0_i32 = arith.constant 0 : i32
    %c0_i32_0 = arith.constant 0 : i32
    return %arg0, %c0_i32 : i32, i32
  }
}

</mosaic_0001>

<llo_original>
// kernel: tpu_custom_call.1
$region0: #{tpu_custom_call.1}
  #allocation0 [shape = 'u32[]', space=smem, size = 0x4, offset = 0x4, fixed_abs, tag = 'smem constant byte address 0x4 - core index']
  #allocation1 [shape = 'u32[144,128]{1,0:T(1,128)}', space=vmem, size = 0x12000, scoped, tag = 'internal scratch']
  %s0 = inlined_call_operand.vmem [shape: f32[8,128], index: 0, kind: input, shape index: {}]
  %s1 = inlined_call_operand.vmem [shape: f32[128,512], index: 1, kind: input, shape index: {}]
  %s2 = inlined_call_operand.vmem [shape: f32[1,512], index: 2, kind: input, shape index: {}]
  %s3 = inlined_call_operand.vmem [shape: f32[512,16], index: 3, kind: input, shape index: {}]
  %s4 = inlined_call_operand.vmem [shape: f32[1,16], index: 4, kind: input, shape index: {}]
  %s5 = inlined_call_operand.hbm [shape: f32[8,16], index: 5, kind: output, shape index: {}]
  %s6 = sld [smem:[#allocation0]]
  $region30: #{tpu_custom_call.1} parent=0
    _
  %s8 = ssub.s32 1, %s6
  %s9 = scalar_select 0, %s8, %s6
  $region1: #{tpu_custom_call.1} parent=0
    #allocation2 [shape = 'u8[4096]{0}', space=vmem, size = 0x1000, scoped, tag = 'output window, operand 0, single buffered']
    #allocation3 [shape = 's32[1]{0}', space=sflag, size = 0x4, scoped, tag = 'scoped memory for tpu_custom_call.1']
    %10 = vsyncpa [#allocation3], 0
    // Predicated region
    $region2: #{tpu_custom_call.1} parent=1 // pred_check
      _
    $region3: #{tpu_custom_call.1} parent=1 // pred_check_branch
      %12 = sbr.rel (0) target = $region5
    $region4: #{tpu_custom_call.1} parent=1 // pred_region
      _
    $region5: #{tpu_custom_call.1} parent=1 // pred_fallthru
      _
    // Predicated region
    $region6: #{tpu_custom_call.1} parent=1 // pred_check
      _
    $region7: #{tpu_custom_call.1} parent=1 // pred_check_branch
      %14 = sbr.rel (0) target = $region9
    $region8: #{tpu_custom_call.1} parent=1 // pred_region
      _
    $region9: #{tpu_custom_call.1} parent=1 // pred_fallthru
      _
    // Predicated region
    $region10: #{tpu_custom_call.1} parent=1 // pred_check
      _
    $region11: #{tpu_custom_call.1} parent=1 // pred_check_branch
      %16 = sbr.rel (0) target = $region13
    $region12: #{tpu_custom_call.1} parent=1 // pred_region
      _
    $region13: #{tpu_custom_call.1} parent=1 // pred_fallthru
      _
    // Predicated region
    $region14: #{tpu_custom_call.1} parent=1 // pred_check
      _
    $region15: #{tpu_custom_call.1} parent=1 // pred_check_branch
      %18 = sbr.rel (0) target = $region17
    $region16: #{tpu_custom_call.1} parent=1 // pred_region
      _
    $region17: #{tpu_custom_call.1} parent=1 // pred_fallthru
      _
    // Predicated region
    $region18: #{tpu_custom_call.1} parent=1 // pred_check
      _
    $region19: #{tpu_custom_call.1} parent=1 // pred_check_branch
      %20 = sbr.rel (0) target = $region21
    $region20: #{tpu_custom_call.1} parent=1 // pred_region
      _
    $region21: #{tpu_custom_call.1} parent=1 // pred_fallthru
      _
    %v21 = vld [vmem:[%s0] sm:$0xff]
    %v22 = vld [vmem:[%s1] sm:$0xff]
    %v23 = vld [vmem:[%s1 + $0x8] sm:$0xff]
    %v24 = vld [vmem:[%s1 + $0x10] sm:$0xff]
    %v25 = vld [vmem:[%s1 + $0x18] sm:$0xff]
    %v26 = vld [vmem:[%s1 + $0x20] sm:$0xff]
    %v27 = vld [vmem:[%s1 + $0x28] sm:$0xff]
    %v28 = vld [vmem:[%s1 + $0x30] sm:$0xff]
    %v29 = vld [vmem:[%s1 + $0x38] sm:$0xff]
    %v30 = vld [vmem:[%s1 + $0x40] sm:$0xff]
    %v31 = vld [vmem:[%s1 + $0x48] sm:$0xff]
    %v32 = vld [vmem:[%s1 + $0x50] sm:$0xff]
    %v33 = vld [vmem:[%s1 + $0x58] sm:$0xff]
    %v34 = vld [vmem:[%s1 + $0x60] sm:$0xff]
    %v35 = vld [vmem:[%s1 + $0x68] sm:$0xff]
    %v36 = vld [vmem:[%s1 + $0x70] sm:$0xff]
    %v37 = vld [vmem:[%s1 + $0x78] sm:$0xff]
    %v38 = vld [vmem:[%s1 + $0x80] sm:$0xff]
    %v39 = vld [vmem:[%s1 + $0x88] sm:$0xff]
    %v40 = vld [vmem:[%s1 + $0x90] sm:$0xff]
    %v41 = vld [vmem:[%s1 + $0x98] sm:$0xff]
    %v42 = vld [vmem:[%s1 + $0xa0] sm:$0xff]
    %v43 = vld [vmem:[%s1 + $0xa8] sm:$0xff]
    %v44 = vld [vmem:[%s1 + $0xb0] sm:$0xff]
    %v45 = vld [vmem:[%s1 + $0xb8] sm:$0xff]
    %v46 = vld [vmem:[%s1 + $0xc0] sm:$0xff]
    %v47 = vld [vmem:[%s1 + $0xc8] sm:$0xff]
    %v48 = vld [vmem:[%s1 + $0xd0] sm:$0xff]
    %v49 = vld [vmem:[%s1 + $0xd8] sm:$0xff]
    %v50 = vld [vmem:[%s1 + $0xe0] sm:$0xff]
    %v51 = vld [vmem:[%s1 + $0xe8] sm:$0xff]
    %v52 = vld [vmem:[%s1 + $0xf0] sm:$0xff]
    %v53 = vld [vmem:[%s1 + $0xf8] sm:$0xff]
    %v54 = vld [vmem:[%s1 + $0x100] sm:$0xff]
    %v55 = vld [vmem:[%s1 + $0x108] sm:$0xff]
    %v56 = vld [vmem:[%s1 + $0x110] sm:$0xff]
    %v57 = vld [vmem:[%s1 + $0x118] sm:$0xff]
    %v58 = vld [vmem:[%s1 + $0x120] sm:$0xff]
    %v59 = vld [vmem:[%s1 + $0x128] sm:$0xff]
    %v60 = vld [vmem:[%s1 + $0x130] sm:$0xff]
    %v61 = vld [vmem:[%s1 + $0x138] sm:$0xff]
    %v62 = vld [vmem:[%s1 + $0x140] sm:$0xff]
    %v63 = vld [vmem:[%s1 + $0x148] sm:$0xff]
    %v64 = vld [vmem:[%s1 + $0x150] sm:$0xff]
    %v65 = vld [vmem:[%s1 + $0x158] sm:$0xff]
    %v66 = vld [vmem:[%s1 + $0x160] sm:$0xff]
    %v67 = vld [vmem:[%s1 + $0x168] sm:$0xff]
    %v68 = vld [vmem:[%s1 + $0x170] sm:$0xff]
    %v69 = vld [vmem:[%s1 + $0x178] sm:$0xff]
    %v70 = vld [vmem:[%s1 + $0x180] sm:$0xff]
    %v71 = vld [vmem:[%s1 + $0x188] sm:$0xff]
    %v72 = vld [vmem:[%s1 + $0x190] sm:$0xff]
    %v73 = vld [vmem:[%s1 + $0x198] sm:$0xff]
    %v74 = vld [vmem:[%s1 + $0x1a0] sm:$0xff]
    %v75 = vld [vmem:[%s1 + $0x1a8] sm:$0xff]
    %v76 = vld [vmem:[%s1 + $0x1b0] sm:$0xff]
    %v77 = vld [vmem:[%s1 + $0x1b8] sm:$0xff]
    %v78 = vld [vmem:[%s1 + $0x1c0] sm:$0xff]
    %v79 = vld [vmem:[%s1 + $0x1c8] sm:$0xff]
    %v80 = vld [vmem:[%s1 + $0x1d0] sm:$0xff]
    %v81 = vld [vmem:[%s1 + $0x1d8] sm:$0xff]
    %v82 = vld [vmem:[%s1 + $0x1e0] sm:$0xff]
    %v83 = vld [vmem:[%s1 + $0x1e8] sm:$0xff]
    %v84 = vld [vmem:[%s1 + $0x1f0] sm:$0xff]
    %v85 = vld [vmem:[%s1 + $0x1f8] sm:$0xff]
    %v86 = vld [vmem:[%s2] sm:$0xf]
    %v88 = vlaneseq
    %v89 = vshrl.u32 %v88, 7
    %v90 = vsub.s32 0, %v89
    %v91 = vrot.slane %v86, %v90
    %v92 = vlaneseq
    %v93 = vshrl.u32 %v92, 7
    %v94 = vsub.s32 1, %v93
    %v95 = vrot.slane %v86, %v94
    %v96 = vlaneseq
    %v97 = vshrl.u32 %v96, 7
    %v98 = vsub.s32 2, %v97
    %v99 = vrot.slane %v86, %v98
    %v100 = vlaneseq
    %v101 = vshrl.u32 %v100, 7
    %v102 = vsub.s32 3, %v101
    %v103 = vrot.slane %v86, %v102
    %108 = vmatprep.subr.mxu0 %v23
    %109 = vmatpush1.msra.mxu0 %v22
    %110 = vmatprep.subr.mxu0 %v27
    %111 = vmatpush1.msra.mxu0 %v26
    %112 = vmatprep.subr.mxu0 %v31
    %113 = vmatpush1.msra.mxu0 %v30
    %114 = vmatprep.subr.mxu0 %v35
    %115 = vmatpush1.msra.mxu0 %v34
    %116 = vmatprep.subr.mxu0 %v39
    %117 = vmatpush1.msra.mxu0 %v38
    %118 = vmatprep.subr.mxu0 %v43
    %119 = vmatpush1.msra.mxu0 %v42
    %120 = vmatprep.subr.mxu0 %v47
    %121 = vmatpush1.msra.mxu0 %v46
    %122 = vmatprep.subr.mxu0 %v51
    %123 = vmatpush1.msra.mxu0 %v50
    %124 = vmatprep.subr.mxu0 %v55
    %125 = vmatpush1.msra.mxu0 %v54
    %126 = vmatprep.subr.mxu0 %v59
    %127 = vmatpush1.msra.mxu0 %v58
    %128 = vmatprep.subr.mxu0 %v63
    %129 = vmatpush1.msra.mxu0 %v62
    %130 = vmatprep.subr.mxu0 %v67
    %131 = vmatpush1.msra.mxu0 %v66
    %132 = vmatprep.subr.mxu0 %v71
    %133 = vmatpush1.msra.mxu0 %v70
    %134 = vmatprep.subr.mxu0 %v75
    %135 = vmatpush1.msra.mxu0 %v74
    %136 = vmatprep.subr.mxu0 %v79
    %137 = vmatpush1.msra.mxu0 %v78
    %138 = vmatprep.subr.mxu0 %v83
    %139 = vmatpush1.msra.mxu0 %v82
    %140 = vmatprep.subr.mxu0 0.0
    %141 = vmatpush1.msra.mxu0 0.0
    %142 = vmatprep.subr.mxu0 0.0
    %143 = vmatpush1.msra.mxu0 0.0
    %144 = vmatprep.subr.mxu0 0.0
    %145 = vmatpush1.msra.mxu0 0.0
    %146 = vmatprep.subr.mxu0 0.0
    %147 = vmatpush1.msra.mxu0 0.0
    %148 = vmatprep.subr.mxu0 0.0
    %149 = vmatpush1.msra.mxu0 0.0
    %150 = vmatprep.subr.mxu0 0.0
    %151 = vmatpush1.msra.mxu0 0.0
    %152 = vmatprep.subr.mxu0 0.0
    %153 = vmatpush1.msra.mxu0 0.0
    %154 = vmatprep.subr.mxu0 0.0
    %155 = vmatpush1.msra.mxu0 0.0
    %156 = vmatprep.subr.mxu0 0.0
    %157 = vmatpush1.msra.mxu0 0.0
    %158 = vmatprep.subr.mxu0 0.0
    %159 = vmatpush1.msra.mxu0 0.0
    %160 = vmatprep.subr.mxu0 0.0
    %161 = vmatpush1.msra.mxu0 0.0
    %162 = vmatprep.subr.mxu0 0.0
    %163 = vmatpush1.msra.mxu0 0.0
    %164 = vmatprep.subr.mxu0 0.0
    %165 = vmatpush1.msra.mxu0 0.0
    %166 = vmatprep.subr.mxu0 0.0
    %167 = vmatpush1.msra.mxu0 0.0
    %168 = vmatprep.subr.mxu0 0.0
    %169 = vmatpush1.msra.mxu0 0.0
    %170 = vmatprep.subr.mxu0 0.0
    %171 = vmatpush1.msra.mxu0 0.0
    %172 = vmatprep.mubr.f32.mxu0 0.0
    %173 = vmatmul.mubr.f32.gmra.mrb[0].mxu0 %v21
    %v174 = vpop.f32.mrb[0].mxu0
    %v175 = vadd.f32 %v91, %v174
    %v176 = vpop.f32.mrb[0].mxu0
    %v177 = vadd.f32 %v95, %v176
    %178 = vdwg.mxu0
    %179 = vmatprep.subr.mxu0 %v25
    %180 = vmatpush1.msra.mxu0 %v24
    %181 = vmatprep.subr.mxu0 %v29
    %182 = vmatpush1.msra.mxu0 %v28
    %183 = vmatprep.subr.mxu0 %v33
    %184 = vmatpush1.msra.mxu0 %v32
    %185 = vmatprep.subr.mxu0 %v37
    %186 = vmatpush1.msra.mxu0 %v36
    %187 = vmatprep.subr.mxu0 %v41
    %188 = vmatpush1.msra.mxu0 %v40
    %189 = vmatprep.subr.mxu0 %v45
    %190 = vmatpush1.msra.mxu0 %v44
    %191 = vmatprep.subr.mxu0 %v49
    %192 = vmatpush1.msra.mxu0 %v48
    %193 = vmatprep.subr.mxu0 %v53
    %194 = vmatpush1.msra.mxu0 %v52
    %195 = vmatprep.subr.mxu0 %v57
    %196 = vmatpush1.msra.mxu0 %v56
    %197 = vmatprep.subr.mxu0 %v61
    %198 = vmatpush1.msra.mxu0 %v60
    %199 = vmatprep.subr.mxu0 %v65
    %200 = vmatpush1.msra.mxu0 %v64
    %201 = vmatprep.subr.mxu0 %v69
    %202 = vmatpush1.msra.mxu0 %v68
    %203 = vmatprep.subr.mxu0 %v73
    %204 = vmatpush1.msra.mxu0 %v72
    %205 = vmatprep.subr.mxu0 %v77
    %206 = vmatpush1.msra.mxu0 %v76
    %207 = vmatprep.subr.mxu0 %v81
    %208 = vmatpush1.msra.mxu0 %v80
    %209 = vmatprep.subr.mxu0 %v85
    %210 = vmatpush1.msra.mxu0 %v84
    %211 = vmatprep.subr.mxu0 0.0
    %212 = vmatpush1.msra.mxu0 0.0
    %213 = vmatprep.subr.mxu0 0.0
    %214 = vmatpush1.msra.mxu0 0.0
    %215 = vmatprep.subr.mxu0 0.0
    %216 = vmatpush1.msra.mxu0 0.0
    %217 = vmatprep.subr.mxu0 0.0
    %218 = vmatpush1.msra.mxu0 0.0
    %219 = vmatprep.subr.mxu0 0.0
    %220 = vmatpush1.msra.mxu0 0.0
    %221 = vmatprep.subr.mxu0 0.0
    %222 = vmatpush1.msra.mxu0 0.0
    %223 = vmatprep.subr.mxu0 0.0
    %224 = vmatpush1.msra.mxu0 0.0
    %225 = vmatprep.subr.mxu0 0.0
    %226 = vmatpush1.msra.mxu0 0.0
    %227 = vmatprep.subr.mxu0 0.0
    %228 = vmatpush1.msra.mxu0 0.0
    %229 = vmatprep.subr.mxu0 0.0
    %230 = vmatpush1.msra.mxu0 0.0
    %231 = vmatprep.subr.mxu0 0.0
    %232 = vmatpush1.msra.mxu0 0.0
    %233 = vmatprep.subr.mxu0 0.0
    %234 = vmatpush1.msra.mxu0 0.0
    %235 = vmatprep.subr.mxu0 0.0
    %236 = vmatpush1.msra.mxu0 0.0
    %237 = vmatprep.subr.mxu0 0.0
    %238 = vmatpush1.msra.mxu0 0.0
    %239 = vmatprep.subr.mxu0 0.0
    %240 = vmatpush1.msra.mxu0 0.0
    %241 = vmatprep.subr.mxu0 0.0
    %242 = vmatpush1.msra.mxu0 0.0
    %243 = vmatprep.mubr.f32.mxu0 0.0
    %244 = vmatmul.mubr.f32.gmra.mrb[0].mxu0 %v21
    %v245 = vpop.f32.mrb[0].mxu0
    %v246 = vadd.f32 %v99, %v245
    %v247 = vpop.f32.mrb[0].mxu0
    %v248 = vadd.f32 %v103, %v247
    %249 = vdwg.mxu0
    %v250 = vmax.f32 %v175, 0.0
    %v251 = vmax.f32 %v177, 0.0
    %v252 = vmax.f32 %v246, 0.0
    %v253 = vmax.f32 %v248, 0.0
    %v254 = vld [vmem:[%s3] sm:$0xff]
    %v255 = vld [vmem:[%s3 + $0x8] sm:$0xff]
    %v256 = vld [vmem:[%s3 + $0x10] sm:$0xff]
    %v257 = vld [vmem:[%s3 + $0x18] sm:$0xff]
    %v258 = vld [vmem:[%s3 + $0x20] sm:$0xff]
    %v259 = vld [vmem:[%s3 + $0x28] sm:$0xff]
    %v260 = vld [vmem:[%s3 + $0x30] sm:$0xff]
    %v261 = vld [vmem:[%s3 + $0x38] sm:$0xff]
    %v262 = vld [vmem:[%s3 + $0x40] sm:$0xff]
    %v263 = vld [vmem:[%s3 + $0x48] sm:$0xff]
    %v264 = vld [vmem:[%s3 + $0x50] sm:$0xff]
    %v265 = vld [vmem:[%s3 + $0x58] sm:$0xff]
    %v266 = vld [vmem:[%s3 + $0x60] sm:$0xff]
    %v267 = vld [vmem:[%s3 + $0x68] sm:$0xff]
    %v268 = vld [vmem:[%s3 + $0x70] sm:$0xff]
    %v269 = vld [vmem:[%s3 + $0x78] sm:$0xff]
    %v270 = vld [vmem:[%s3 + $0x80] sm:$0xff]
    %v271 = vld [vmem:[%s3 + $0x88] sm:$0xff]
    %v272 = vld [vmem:[%s3 + $0x90] sm:$0xff]
    %v273 = vld [vmem:[%s3 + $0x98] sm:$0xff]
    %v274 = vld [vmem:[%s3 + $0xa0] sm:$0xff]
    %v275 = vld [vmem:[%s3 + $0xa8] sm:$0xff]
    %v276 = vld [vmem:[%s3 + $0xb0] sm:$0xff]
    %v277 = vld [vmem:[%s3 + $0xb8] sm:$0xff]
    %v278 = vld [vmem:[%s3 + $0xc0] sm:$0xff]
    %v279 = vld [vmem:[%s3 + $0xc8] sm:$0xff]
    %v280 = vld [vmem:[%s3 + $0xd0] sm:$0xff]
    %v281 = vld [vmem:[%s3 + $0xd8] sm:$0xff]
    %v282 = vld [vmem:[%s3 + $0xe0] sm:$0xff]
    %v283 = vld [vmem:[%s3 + $0xe8] sm:$0xff]
    %v284 = vld [vmem:[%s3 + $0xf0] sm:$0xff]
    %v285 = vld [vmem:[%s3 + $0xf8] sm:$0xff]
    %v286 = vld [vmem:[%s3 + $0x100] sm:$0xff]
    %v287 = vld [vmem:[%s3 + $0x108] sm:$0xff]
    %v288 = vld [vmem:[%s3 + $0x110] sm:$0xff]
    %v289 = vld [vmem:[%s3 + $0x118] sm:$0xff]
    %v290 = vld [vmem:[%s3 + $0x120] sm:$0xff]
    %v291 = vld [vmem:[%s3 + $0x128] sm:$0xff]
    %v292 = vld [vmem:[%s3 + $0x130] sm:$0xff]
    %v293 = vld [vmem:[%s3 + $0x138] sm:$0xff]
    %v294 = vld [vmem:[%s3 + $0x140] sm:$0xff]
    %v295 = vld [vmem:[%s3 + $0x148] sm:$0xff]
    %v296 = vld [vmem:[%s3 + $0x150] sm:$0xff]
    %v297 = vld [vmem:[%s3 + $0x158] sm:$0xff]
    %v298 = vld [vmem:[%s3 + $0x160] sm:$0xff]
    %v299 = vld [vmem:[%s3 + $0x168] sm:$0xff]
    %v300 = vld [vmem:[%s3 + $0x170] sm:$0xff]
    %v301 = vld [vmem:[%s3 + $0x178] sm:$0xff]
    %v302 = vld [vmem:[%s3 + $0x180] sm:$0xff]
    %v303 = vld [vmem:[%s3 + $0x188] sm:$0xff]
    %v304 = vld [vmem:[%s3 + $0x190] sm:$0xff]
    %v305 = vld [vmem:[%s3 + $0x198] sm:$0xff]
    %v306 = vld [vmem:[%s3 + $0x1a0] sm:$0xff]
    %v307 = vld [vmem:[%s3 + $0x1a8] sm:$0xff]
    %v308 = vld [vmem:[%s3 + $0x1b0] sm:$0xff]
    %v309 = vld [vmem:[%s3 + $0x1b8] sm:$0xff]
    %v310 = vld [vmem:[%s3 + $0x1c0] sm:$0xff]
    %v311 = vld [vmem:[%s3 + $0x1c8] sm:$0xff]
    %v312 = vld [vmem:[%s3 + $0x1d0] sm:$0xff]
    %v313 = vld [vmem:[%s3 + $0x1d8] sm:$0xff]
    %v314 = vld [vmem:[%s3 + $0x1e0] sm:$0xff]
    %v315 = vld [vmem:[%s3 + $0x1e8] sm:$0xff]
    %v316 = vld [vmem:[%s3 + $0x1f0] sm:$0xff]
    %v317 = vld [vmem:[%s3 + $0x1f8] sm:$0xff]
    %v318 = vld [vmem:[%s4] sm:$0x1]
    %v320 = vlaneseq
    %v321 = vshrl.u32 %v320, 7
    %v322 = vsub.s32 0, %v321
    %v323 = vrot.slane %v318, %v322
    %325 = vmatprep.subr.mxu0 0.0
    %326 = vmatpush1.msra.mxu0 %v254
    %327 = vmatprep.subr.mxu0 0.0
    %328 = vmatpush1.msra.mxu0 %v255
    %329 = vmatprep.subr.mxu0 0.0
    %330 = vmatpush1.msra.mxu0 %v256
    %331 = vmatprep.subr.mxu0 0.0
    %332 = vmatpush1.msra.mxu0 %v257
    %333 = vmatprep.subr.mxu0 0.0
    %334 = vmatpush1.msra.mxu0 %v258
    %335 = vmatprep.subr.mxu0 0.0
    %336 = vmatpush1.msra.mxu0 %v259
    %337 = vmatprep.subr.mxu0 0.0
    %338 = vmatpush1.msra.mxu0 %v260
    %339 = vmatprep.subr.mxu0 0.0
    %340 = vmatpush1.msra.mxu0 %v261
    %341 = vmatprep.subr.mxu0 0.0
    %342 = vmatpush1.msra.mxu0 %v262
    %343 = vmatprep.subr.mxu0 0.0
    %344 = vmatpush1.msra.mxu0 %v263
    %345 = vmatprep.subr.mxu0 0.0
    %346 = vmatpush1.msra.mxu0 %v264
    %347 = vmatprep.subr.mxu0 0.0
    %348 = vmatpush1.msra.mxu0 %v265
    %349 = vmatprep.subr.mxu0 0.0
    %350 = vmatpush1.msra.mxu0 %v266
    %351 = vmatprep.subr.mxu0 0.0
    %352 = vmatpush1.msra.mxu0 %v267
    %353 = vmatprep.subr.mxu0 0.0
    %354 = vmatpush1.msra.mxu0 %v268
    %355 = vmatprep.subr.mxu0 0.0
    %356 = vmatpush1.msra.mxu0 %v269
    %357 = vmatprep.subr.mxu0 0.0
    %358 = vmatpush1.msra.mxu0 %v270
    %359 = vmatprep.subr.mxu0 0.0
    %360 = vmatpush1.msra.mxu0 %v271
    %361 = vmatprep.subr.mxu0 0.0
    %362 = vmatpush1.msra.mxu0 %v272
    %363 = vmatprep.subr.mxu0 0.0
    %364 = vmatpush1.msra.mxu0 %v273
    %365 = vmatprep.subr.mxu0 0.0
    %366 = vmatpush1.msra.mxu0 %v274
    %367 = vmatprep.subr.mxu0 0.0
    %368 = vmatpush1.msra.mxu0 %v275
    %369 = vmatprep.subr.mxu0 0.0
    %370 = vmatpush1.msra.mxu0 %v276
    %371 = vmatprep.subr.mxu0 0.0
    %372 = vmatpush1.msra.mxu0 %v277
    %373 = vmatprep.subr.mxu0 0.0
    %374 = vmatpush1.msra.mxu0 %v278
    %375 = vmatprep.subr.mxu0 0.0
    %376 = vmatpush1.msra.mxu0 %v279
    %377 = vmatprep.subr.mxu0 0.0
    %378 = vmatpush1.msra.mxu0 %v280
    %379 = vmatprep.subr.mxu0 0.0
    %380 = vmatpush1.msra.mxu0 %v281
    %381 = vmatprep.subr.mxu0 0.0
    %382 = vmatpush1.msra.mxu0 %v282
    %383 = vmatprep.subr.mxu0 0.0
    %384 = vmatpush1.msra.mxu0 %v283
    %385 = vmatprep.subr.mxu0 0.0
    %386 = vmatpush1.msra.mxu0 %v284
    %387 = vmatprep.subr.mxu0 0.0
    %388 = vmatpush1.msra.mxu0 %v285
    %389 = vmatprep.mubr.f32.mxu0 %v251
    %390 = vmatmul.mubr.f32.gmra.mrb[0].mxu0 %v250
    %v391 = vpop.f32.mrb[0].mxu0
    %v392 = vadd.f32 %v323, %v391
    %v393 = vpop.f32.mrb[0].mxu0
    %394 = vdwg.mxu0
    %395 = vmatprep.subr.mxu0 0.0
    %396 = vmatpush1.msra.mxu0 %v286
    %397 = vmatprep.subr.mxu0 0.0
    %398 = vmatpush1.msra.mxu0 %v287
    %399 = vmatprep.subr.mxu0 0.0
    %400 = vmatpush1.msra.mxu0 %v288
    %401 = vmatprep.subr.mxu0 0.0
    %402 = vmatpush1.msra.mxu0 %v289
    %403 = vmatprep.subr.mxu0 0.0
    %404 = vmatpush1.msra.mxu0 %v290
    %405 = vmatprep.subr.mxu0 0.0
    %406 = vmatpush1.msra.mxu0 %v291
    %407 = vmatprep.subr.mxu0 0.0
    %408 = vmatpush1.msra.mxu0 %v292
    %409 = vmatprep.subr.mxu0 0.0
    %410 = vmatpush1.msra.mxu0 %v293
    %411 = vmatprep.subr.mxu0 0.0
    %412 = vmatpush1.msra.mxu0 %v294
    %413 = vmatprep.subr.mxu0 0.0
    %414 = vmatpush1.msra.mxu0 %v295
    %415 = vmatprep.subr.mxu0 0.0
    %416 = vmatpush1.msra.mxu0 %v296
    %417 = vmatprep.subr.mxu0 0.0
    %418 = vmatpush1.msra.mxu0 %v297
    %419 = vmatprep.subr.mxu0 0.0
    %420 = vmatpush1.msra.mxu0 %v298
    %421 = vmatprep.subr.mxu0 0.0
    %422 = vmatpush1.msra.mxu0 %v299
    %423 = vmatprep.subr.mxu0 0.0
    %424 = vmatpush1.msra.mxu0 %v300
    %425 = vmatprep.subr.mxu0 0.0
    %426 = vmatpush1.msra.mxu0 %v301
    %427 = vmatprep.subr.mxu0 0.0
    %428 = vmatpush1.msra.mxu0 %v302
    %429 = vmatprep.subr.mxu0 0.0
    %430 = vmatpush1.msra.mxu0 %v303
    %431 = vmatprep.subr.mxu0 0.0
    %432 = vmatpush1.msra.mxu0 %v304
    %433 = vmatprep.subr.mxu0 0.0
    %434 = vmatpush1.msra.mxu0 %v305
    %435 = vmatprep.subr.mxu0 0.0
    %436 = vmatpush1.msra.mxu0 %v306
    %437 = vmatprep.subr.mxu0 0.0
    %438 = vmatpush1.msra.mxu0 %v307
    %439 = vmatprep.subr.mxu0 0.0
    %440 = vmatpush1.msra.mxu0 %v308
    %441 = vmatprep.subr.mxu0 0.0
    %442 = vmatpush1.msra.mxu0 %v309
    %443 = vmatprep.subr.mxu0 0.0
    %444 = vmatpush1.msra.mxu0 %v310
    %445 = vmatprep.subr.mxu0 0.0
    %446 = vmatpush1.msra.mxu0 %v311
    %447 = vmatprep.subr.mxu0 0.0
    %448 = vmatpush1.msra.mxu0 %v312
    %449 = vmatprep.subr.mxu0 0.0
    %450 = vmatpush1.msra.mxu0 %v313
    %451 = vmatprep.subr.mxu0 0.0
    %452 = vmatpush1.msra.mxu0 %v314
    %453 = vmatprep.subr.mxu0 0.0
    %454 = vmatpush1.msra.mxu0 %v315
    %455 = vmatprep.subr.mxu0 0.0
    %456 = vmatpush1.msra.mxu0 %v316
    %457 = vmatprep.subr.mxu0 0.0
    %458 = vmatpush1.msra.mxu0 %v317
    %459 = vmatprep.mubr.f32.mxu0 %v253
    %460 = vmatmul.mubr.f32.gmra.mrb[0].mxu0 %v252
    %v461 = vpop.f32.mrb[0].mxu0
    %v462 = vadd.f32 %v392, %v461
    %v463 = vpop.f32.mrb[0].mxu0
    %464 = vdwg.mxu0
    %vm465 = vcmask 130048
    %466 = vst.msk [vmem:[#allocation2] sm:$0xff] %vm465, %v462
    // Predicated region
    $region22: #{tpu_custom_call.1} parent=1 // pred_check
      _
    $region23: #{tpu_custom_call.1} parent=1 // pred_check_branch
      %468 = sbr.rel (0) target = $region25
    $region24: #{tpu_custom_call.1} parent=1 // pred_region
      %s470 = ssub.s32 128, 128
      %471 = vsyncadd [#allocation3], %s470
      %s473 = sshll.u32 [#allocation2], 4
      %s474 = int_to_ptr.vmem [resolvable:$true] %s473
      %476 = dma.vmem_to_hbm [thread:$0]  %s474, 128, %s5, [#allocation3]
    $region25: #{tpu_custom_call.1} parent=1 // pred_fallthru
      _
    // Predicated region
    $region26: #{tpu_custom_call.1} parent=1 // pred_check
      _
    $region27: #{tpu_custom_call.1} parent=1 // pred_check_branch
      %478 = sbr.rel (0) target = $region29
    $region28: #{tpu_custom_call.1} parent=1 // pred_region
      %479 = dma.done [#allocation3], 128
    $region29: #{tpu_custom_call.1} parent=1 // pred_fallthru
      _
    %480 = vsyncpa [#allocation3], 1

</llo_original>
